<compile_context>
chip_gen: v5e
topology: v5e:2x2
jax: 0.10.0
libtpu: 0.0.40
codegen_flags: <defaults>
</compile_context>

<pallas_src>
import math

import jax
import jax.numpy as jnp
from jax.experimental import pallas as pl
from jax.experimental.pallas import tpu as pltpu

_MiB = 1024 * 1024


def _round_up(x: int, m: int) -> int:
    return ((x + m - 1) // m) * m


def _make_kernel(use_bf16_matmul: bool, approx_gelu: bool):
    """GELU(x @ W + b) for one (tm, tn_or_I) output tile; full K = H per block."""

    def kernel(x_ref, w_ref, b_ref, o_ref):
        x = x_ref[...]
        w = w_ref[...]
        if use_bf16_matmul:
            # bf16 operands run at native MXU rate on v6e/v7x; accumulate in f32.
            x = x.astype(jnp.bfloat16)
            w = w.astype(jnp.bfloat16)
        y = jnp.dot(x, w, preferred_element_type=jnp.float32)
        y = y + b_ref[...].astype(jnp.float32)
        if approx_gelu:
            # tanh-approx GELU: tanh goes to the EUP slot (free w.r.t. VALU).
            c = jnp.float32(0.7978845608028654)  # sqrt(2/pi)
            act = 0.5 * y * (1.0 + jnp.tanh(c * (y + 0.044715 * (y * y * y))))
        else:
            # Exact erf-GELU in f32 (matches ACT2FN["gelu"] / torch default).
            act = 0.5 * y * (1.0 + jax.lax.erf(y * jnp.float32(1.0 / math.sqrt(2.0))))
        o_ref[...] = act.astype(o_ref.dtype)

    return kernel


def layoutlm_intermediate(hidden_states, weight, bias, *, tm=512, tn=1024,
                          use_bf16_matmul=False, approx_gelu=False,
                          vmem_budget_bytes=30 * _MiB):
    """LayoutLMIntermediate forward: GELU(hidden_states @ weight + bias).

    hidden_states: (B, S, H)
    weight:        (H, I)   (transposed nn.Linear weight)
    bias:          (I,)
    returns (B, S, I) in hidden_states.dtype
    """
    B, S, H = hidden_states.shape
    I = weight.shape[1]
    M = B * S
    out_dtype = hidden_states.dtype

    x2d = hidden_states.reshape(M, H)   # contiguous reshape, no copy
    b2d = bias.reshape(1, I)

    x_sz = jnp.dtype(hidden_states.dtype).itemsize
    w_sz = jnp.dtype(weight.dtype).itemsize
    o_sz = jnp.dtype(out_dtype).itemsize

    flops = 2 * M * H * I
    transcendentals = M * I

    kernel = _make_kernel(use_bf16_matmul, approx_gelu)

    # Keep tm a multiple of 8, no larger than the (8-aligned) row count.
    tm = min(tm, _round_up(M, 8))

    # ---------------- Path A: full-I (minimum HBM traffic) ----------------
    def full_i_footprint(tm_):
        # Conservative: count weight/bias double-buffered even though their
        # block index is constant (Pallas only DMAs them once).
        return (2 * tm_ * H * x_sz
                + 2 * H * I * w_sz
                + 2 * _round_up(I, 128) * w_sz
                + 2 * tm_ * I * o_sz)

    tm_full = tm
    full_i_fits = False
    while True:
        if full_i_footprint(tm_full) <= vmem_budget_bytes:
            full_i_fits = True
            break
        if tm_full <= 64:
            break
        tm_full = max(64, _round_up(tm_full // 2, 8))

    if full_i_fits:
        footprint = full_i_footprint(tm_full)
        bytes_accessed = M * H * x_sz + H * I * w_sz + I * w_sz + M * I * o_sz
        out = pl.pallas_call(
            kernel,
            out_shape=jax.ShapeDtypeStruct((M, I), out_dtype),
            grid=(pl.cdiv(M, tm_full),),
            in_specs=[
                pl.BlockSpec((tm_full, H), lambda m: (m, 0)),  # activations
                pl.BlockSpec((H, I), lambda m: (0, 0)),        # weight: fetched once
                pl.BlockSpec((1, I), lambda m: (0, 0)),        # bias:   fetched once
            ],
            out_specs=pl.BlockSpec((tm_full, I), lambda m: (m, 0)),
            compiler_params=pltpu.CompilerParams(
                dimension_semantics=("parallel",),
                vmem_limit_bytes=int(min(max(footprint * 1.25 + 4 * _MiB,
                                             32 * _MiB), 40 * _MiB)),
            ),
            cost_estimate=pl.CostEstimate(
                flops=flops, transcendentals=transcendentals,
                bytes_accessed=int(bytes_accessed)),
        )(x2d, weight, b2d)
        return out.reshape(B, S, I)

    # ------------- Path B: tiled (n outer, m innermost) fallback ----------
    tn = max(128, (min(tn, _round_up(I, 128)) // 128) * 128)

    def tiled_footprint(tm_, tn_):
        return 2 * (tm_ * H * x_sz + H * tn_ * w_sz + tn_ * w_sz + tm_ * tn_ * o_sz)

    while tiled_footprint(tm, tn) > vmem_budget_bytes and tn > 128:
        tn = max(128, ((tn // 2) // 128) * 128)
    while tiled_footprint(tm, tn) > vmem_budget_bytes and tm > 8:
        tm = max(8, _round_up(tm // 2, 8))

    n_tiles = pl.cdiv(I, tn)
    footprint = tiled_footprint(tm, tn)
    bytes_accessed = (n_tiles * M * H * x_sz + H * I * w_sz + I * w_sz
                      + M * I * o_sz)
    out = pl.pallas_call(
        kernel,
        out_shape=jax.ShapeDtypeStruct((M, I), out_dtype),
        grid=(n_tiles, pl.cdiv(M, tm)),   # m innermost -> weight tile reused over m
        in_specs=[
            pl.BlockSpec((tm, H), lambda n, m: (m, 0)),
            pl.BlockSpec((H, tn), lambda n, m: (0, n)),
            pl.BlockSpec((1, tn), lambda n, m: (0, n)),
        ],
        out_specs=pl.BlockSpec((tm, tn), lambda n, m: (m, n)),
        compiler_params=pltpu.CompilerParams(
            dimension_semantics=("parallel", "parallel"),
            vmem_limit_bytes=int(min(max(footprint * 1.25 + 4 * _MiB,
                                         32 * _MiB), 40 * _MiB)),
        ),
        cost_estimate=pl.CostEstimate(
            flops=flops, transcendentals=transcendentals,
            bytes_accessed=int(bytes_accessed)),
    )(x2d, weight, b2d)
    return out.reshape(B, S, I)


def _reference(hidden_states, weight, bias):
    y = jnp.einsum("bsh,hi->bsi", hidden_states, weight,
                   precision=jax.lax.Precision.HIGHEST) + bias
    return 0.5 * y * (1.0 + jax.lax.erf(y / jnp.sqrt(jnp.float32(2.0))))


if __name__ == "__main__":
    # Small config consistent with the module: hidden_size=32, intermediate=64.
    batch, seq, hidden, intermediate = 2, 8, 32, 64

    key = jax.random.PRNGKey(0)
    kx, kw, kb = jax.random.split(key, 3)
    hidden_states = jax.random.normal(kx, (batch, seq, hidden), dtype=jnp.float32)
    # Deterministic synthetic parameters (no checkpoint load).
    weight = jax.random.normal(kw, (hidden, intermediate), dtype=jnp.float32) * 0.02
    bias = jax.random.normal(kb, (intermediate,), dtype=jnp.float32) * 0.02

    ref = _reference(hidden_states, weight, bias)

    # Default path: exact erf-GELU, f32 matmul (PyTorch parity).
    out = layoutlm_intermediate(hidden_states, weight, bias)
    out = jax.block_until_ready(out)
    assert out.shape == (batch, seq, intermediate)
    assert jnp.allclose(out, ref, atol=2e-3, rtol=2e-3), (
        float(jnp.max(jnp.abs(out - ref))))

    # Fast path recommended on v6e/v7x: bf16 MXU operands + tanh-approx GELU.
    out_fast = layoutlm_intermediate(hidden_states, weight, bias,
                                     use_bf16_matmul=True, approx_gelu=True)
    out_fast = jax.block_until_ready(out_fast)
    assert jnp.allclose(out_fast, ref, atol=2e-2, rtol=2e-2)

    print("KERNEL_OK")
</pallas_src>

<mosaic_0001>
module attributes {stable_mosaic.version = 11 : i64} {
  func.func @kernel(%arg0: i32, %arg1: memref<16x32xf32, #tpu.memory_space<vmem>>, %arg2: memref<32x64xf32, #tpu.memory_space<vmem>>, %arg3: memref<1x64xf32, #tpu.memory_space<vmem>>, %arg4: memref<16x64xf32, #tpu.memory_space<vmem>>) attributes {dimension_semantics = [#tpu.dimension_semantics<parallel>], iteration_bounds = array<i64: 1>, scalar_prefetch = 0 : i64, scratch_operands = 0 : i64, tpu.core_type = #tpu.core_type<tc>, window_params = [{transform_indices = @transform_0, window_bounds = array<i64: 16, 32>}, {pipeline_mode = #tpu.pipeline_mode<synchronous>, transform_indices = @transform_1, window_bounds = array<i64: 32, 64>}, {pipeline_mode = #tpu.pipeline_mode<synchronous>, transform_indices = @transform_2, window_bounds = array<i64: 1, 64>}, {transform_indices = @transform_3, window_bounds = array<i64: 16, 64>}]} {
    %c0 = arith.constant 0 : index
    %c0_0 = arith.constant 0 : index
    %0 = vector.load %arg1[%c0, %c0_0] : memref<16x32xf32, #tpu.memory_space<vmem>>, vector<16x32xf32>
    %c0_1 = arith.constant 0 : index
    %c0_2 = arith.constant 0 : index
    %1 = vector.load %arg2[%c0_1, %c0_2] : memref<32x64xf32, #tpu.memory_space<vmem>>, vector<32x64xf32>
    %cst = arith.constant dense<0.000000e+00> : vector<16x64xf32>
    %2 = tpu.matmul %0, %1, %cst {dimension_numbers = #tpu.dot_dimension_numbers<[1], [0], [0], [1], [0, 0, 1, 1], [], []>} : vector<16x32xf32>, vector<32x64xf32>, vector<16x64xf32> -> vector<16x64xf32>
    %c0_3 = arith.constant 0 : index
    %c0_4 = arith.constant 0 : index
    %3 = vector.load %arg3[%c0_3, %c0_4] : memref<1x64xf32, #tpu.memory_space<vmem>>, vector<1x64xf32>
    %4 = vector.broadcast %3 : vector<1x64xf32> to vector<16x64xf32>
    %5 = arith.addf %2, %4 : vector<16x64xf32>
    %cst_5 = arith.constant 5.000000e-01 : f32
    %6 = vector.broadcast %cst_5 : f32 to vector<16x64xf32>
    %7 = arith.mulf %6, %5 : vector<16x64xf32>
    %cst_6 = arith.constant 0.707106769 : f32
    %8 = vector.broadcast %cst_6 : f32 to vector<16x64xf32>
    %9 = arith.mulf %5, %8 : vector<16x64xf32>
    %10 = math.erf %9 : vector<16x64xf32>
    %cst_7 = arith.constant 1.000000e+00 : f32
    %11 = vector.broadcast %cst_7 : f32 to vector<16x64xf32>
    %12 = arith.addf %11, %10 : vector<16x64xf32>
    %13 = arith.mulf %7, %12 : vector<16x64xf32>
    %c0_8 = arith.constant 0 : index
    %c0_9 = arith.constant 0 : index
    %14 = vector.load %arg4[%c0_8, %c0_9] : memref<16x64xf32, #tpu.memory_space<vmem>>, vector<16x64xf32>
    tpu.vector_store %arg4[%c0_8, %c0_9], %13 {strides = array<i32>} : memref<16x64xf32, #tpu.memory_space<vmem>>, vector<16x64xf32>,
    return
  }
  func.func @transform_0(%arg0: i32) -> (i32, i32) {
    %c0_i32 = arith.constant 0 : i32
    %c0_i32_0 = arith.constant 0 : i32
    return %arg0, %c0_i32 : i32, i32
  }
  func.func @transform_1(%arg0: i32) -> (i32, i32) {
    %c0_i32 = arith.constant 0 : i32
    %c0_i32_0 = arith.constant 0 : i32
    %c0_i32_1 = arith.constant 0 : i32
    return %c0_i32, %c0_i32_0 : i32, i32
  }
  func.func @transform_2(%arg0: i32) -> (i32, i32) {
    %c0_i32 = arith.constant 0 : i32
    %c0_i32_0 = arith.constant 0 : i32
    %c0_i32_1 = arith.constant 0 : i32
    return %c0_i32, %c0_i32_0 : i32, i32
  }
  func.func @transform_3(%arg0: i32) -> (i32, i32) {
    %c0_i32 = arith.constant 0 : i32
    %c0_i32_0 = arith.constant 0 : i32
    return %arg0, %c0_i32 : i32, i32
  }
}

</mosaic_0001>

<llo_original>
// kernel: tpu_custom_call.1
$region0: #{tpu_custom_call.1}
  #allocation0 [shape = 'u32[]', space=smem, size = 0x4, offset = 0x4, fixed_abs, tag = 'smem constant byte address 0x4 - core index']
  #allocation1 [shape = 'u32[72,128]{1,0:T(1,128)}', space=vmem, size = 0x9000, scoped, tag = 'internal scratch']
  %s0 = inlined_call_operand.hbm [shape: f32[16,32], index: 0, kind: input, shape index: {}]
  %s1 = inlined_call_operand.hbm [shape: f32[32,64], index: 1, kind: input, shape index: {}]
  %s2 = inlined_call_operand.vmem [shape: f32[1,64], index: 2, kind: input, shape index: {}]
  %s3 = inlined_call_operand.hbm [shape: f32[16,64], index: 3, kind: output, shape index: {}]
  %s4 = sld [smem:[#allocation0]]
  $region30: #{tpu_custom_call.1} parent=0
    _
  %s6 = ssub.s32 1, %s4
  %s7 = scalar_select 0, %s6, %s4
  $region1: #{tpu_custom_call.1} parent=0
    #allocation2 [shape = 'u8[8192]{0}', space=vmem, size = 0x2000, scoped, tag = 'input window, operand 0, single buffered']
    #allocation3 [shape = 's32[1]{0}', space=sflag, size = 0x4, scoped, tag = 'scoped memory for tpu_custom_call.1']
    #allocation4 [shape = 's32[1]{0}', space=sflag, size = 0x4, scoped, tag = 'scoped memory for tpu_custom_call.1']
    #allocation5 [shape = 'u8[16384]{0}', space=vmem, size = 0x4000, scoped, tag = 'input window, operand 1, single buffered']
    #allocation6 [shape = 's32[1]{0}', space=sflag, size = 0x4, scoped, tag = 'scoped memory for tpu_custom_call.1']
    #allocation7 [shape = 'u8[8192]{0}', space=vmem, size = 0x2000, scoped, tag = 'output window, operand 0, single buffered']
    %8 = vsyncpa [#allocation3], 0
    %9 = vsyncpa [#allocation6], 0
    %10 = vsyncpa [#allocation4], 0
    // Predicated region
    $region2: #{tpu_custom_call.1} parent=1 // pred_check
      _
    $region3: #{tpu_custom_call.1} parent=1 // pred_check_branch
      %12 = sbr.rel (0) target = $region5
    $region4: #{tpu_custom_call.1} parent=1 // pred_region
      %14 = vsyncadd [#allocation3], 0
      %s15 = sshll.u32 %s0, 4
      %s16 = int_to_ptr.hbm [resolvable:$true] %s15
      %s17 = sshll.u32 [#allocation2], 4
      %s18 = int_to_ptr.vmem [resolvable:$true] %s17
      %23 = dma.hbm_to_vmem [thread:$0]  %s16, 256, %s18, [#allocation3], 128, 128, 8
    $region5: #{tpu_custom_call.1} parent=1 // pred_fallthru
      _
    // Predicated region
    $region6: #{tpu_custom_call.1} parent=1 // pred_check
      _
    $region7: #{tpu_custom_call.1} parent=1 // pred_check_branch
      %25 = sbr.rel (0) target = $region9
    $region8: #{tpu_custom_call.1} parent=1 // pred_region
      %27 = vsyncadd [#allocation6], 0
      %s28 = sshll.u32 %s1, 4
      %s29 = int_to_ptr.hbm [resolvable:$true] %s28
      %s30 = sshll.u32 [#allocation5], 4
      %s31 = int_to_ptr.vmem [resolvable:$true] %s30
      %36 = dma.hbm_to_vmem [thread:$0]  %s29, 512, %s31, [#allocation6], 128, 128, 8
    $region9: #{tpu_custom_call.1} parent=1 // pred_fallthru
      _
    // Predicated region
    $region10: #{tpu_custom_call.1} parent=1 // pred_check
      _
    $region11: #{tpu_custom_call.1} parent=1 // pred_check_branch
      %38 = sbr.rel (0) target = $region13
    $region12: #{tpu_custom_call.1} parent=1 // pred_region
      _
    $region13: #{tpu_custom_call.1} parent=1 // pred_fallthru
      _
    // Predicated region
    $region14: #{tpu_custom_call.1} parent=1 // pred_check
      _
    $region15: #{tpu_custom_call.1} parent=1 // pred_check_branch
      %40 = sbr.rel (0) target = $region17
    $region16: #{tpu_custom_call.1} parent=1 // pred_region
      %42 = dma.done [#allocation3], 256
    $region17: #{tpu_custom_call.1} parent=1 // pred_fallthru
      _
    // Predicated region
    $region18: #{tpu_custom_call.1} parent=1 // pred_check
      _
    $region19: #{tpu_custom_call.1} parent=1 // pred_check_branch
      %44 = sbr.rel (0) target = $region21
    $region20: #{tpu_custom_call.1} parent=1 // pred_region
      %46 = dma.done [#allocation6], 512
    $region21: #{tpu_custom_call.1} parent=1 // pred_fallthru
      _
    %v47 = vld [vmem:[#allocation2] sm:$0xff]
    %v48 = vld [vmem:[#allocation2 + $0x8] sm:$0xff]
    %v49 = vld [vmem:[#allocation5] sm:$0xff]
    %v50 = vld [vmem:[#allocation5 + $0x8] sm:$0xff]
    %v51 = vld [vmem:[#allocation5 + $0x10] sm:$0xff]
    %v52 = vld [vmem:[#allocation5 + $0x18] sm:$0xff]
    %v53 = vld [vmem:[%s2] sm:$0x1]
    %v55 = vperm.slane %v53, 0
    %vm57 = vcmask 261120
    %v59 = vsel %vm57, %v47, 0
    %v62 = vsel %vm57, %v48, 0
    %64 = vmatpush.msra.mxu0 0.0
    %65 = vmatpush.msra.mxu0 0.0
    %66 = vmatpush.msra.mxu0 0.0
    %67 = vmatpush.msra.mxu0 0.0
    %68 = vmatpush.msra.mxu0 0.0
    %69 = vmatpush.msra.mxu0 0.0
    %70 = vmatpush.msra.mxu0 0.0
    %71 = vmatpush.msra.mxu0 0.0
    %72 = vmatpush.msra.mxu0 0.0
    %73 = vmatpush.msra.mxu0 0.0
    %74 = vmatpush.msra.mxu0 0.0
    %75 = vmatpush.msra.mxu0 0.0
    %76 = vmatpush.msra.mxu0 %v52
    %77 = vmatpush.msra.mxu0 %v51
    %78 = vmatpush.msra.mxu0 %v50
    %79 = vmatpush.msra.mxu0 %v49
    %80 = vmatmul.f32.gmra.mxu0 %v59
    %v81 = vpop.f32.mrf.mxu0
    %v82 = vadd.f32 %v55, %v81
    %83 = vmatmul.f32.gmra.mxu0 %v62
    %v84 = vpop.f32.mrf.mxu0
    %v85 = vadd.f32 %v55, %v84
    %86 = vdwg.mxu0
    %v87 = vmul.f32 %v82, 0.5
    %v88 = vmul.f32 %v85, 0.5
    %v89 = vmul.f32 %v82, 0.70710677
    %v90 = vmul.f32 %v85, 0.70710677
    %v91 = vmul.f32 %v89, %v89
    %v92 = vmin.f32 16.0, %v91
    %v93 = vmul.f32 %v92, 2.1237322e-06
    %v94 = vadd.f32 %v93, 0.00028619796
    %v95 = vmul.f32 %v92, %v94
    %v96 = vadd.f32 %v95, 0.0036580483
    %v97 = vmul.f32 %v92, %v96
    %v98 = vadd.f32 %v97, 0.05243302
    %v99 = vmul.f32 %v92, %v98
    %v100 = vadd.f32 %v99, 0.18741608
    %v101 = vmul.f32 %v92, %v100
    %v102 = vadd.f32 %v101, 1.1283791
    %v103 = vmul.f32 %v89, %v102
    %v104 = vmul.f32 %v92, 3.8918573e-05
    %v105 = vadd.f32 %v104, 0.001143296
    %v106 = vmul.f32 %v92, %v105
    %v107 = vadd.f32 %v106, 0.014752088
    %v108 = vmul.f32 %v92, %v107
    %v109 = vadd.f32 %v108, 0.112945676
    %v110 = vmul.f32 %v92, %v109
    %v111 = vadd.f32 %v110, 0.4994258
    %v112 = vmul.f32 %v92, %v111
    %v113 = vadd.f32 %v112, 1.0
    %v114 = vrcp.pop %v113
    %v115 = vmul.f32 %v113, %v114
    %v116 = vsub.f32 1.0, %v115
    %v117 = vmul.f32 %v114, %v116
    %v118 = vadd.f32 %v114, %v117
    %vm119 = vweird.f32 %v113
    %vm120 = vweird.f32 %v114
    %vm121 = vmor %vm119, %vm120
    %v122 = vsel %vm121, %v114, %v118
    %v123 = vand.u32 2147483647, %v113
    %vm124 = vcmp.eq.f32.partialorder %v123, 8.507059e+37
    %v125 = vand.u32 %v113, 2147483648
    %v126 = vor.u32 1.1754944e-38, %v125
    %v127 = vsel %vm124, %v126, %v122
    %v128 = vmul.f32 %v103, %v127
    %v129 = vmin.f32 %v128, 1.0
    %v130 = vmax.f32 %v129, -1.0
    %v131 = vmul.f32 %v90, %v90
    %v132 = vmin.f32 16.0, %v131
    %v133 = vmul.f32 %v132, 2.1237322e-06
    %v134 = vadd.f32 %v133, 0.00028619796
    %v135 = vmul.f32 %v132, %v134
    %v136 = vadd.f32 %v135, 0.0036580483
    %v137 = vmul.f32 %v132, %v136
    %v138 = vadd.f32 %v137, 0.05243302
    %v139 = vmul.f32 %v132, %v138
    %v140 = vadd.f32 %v139, 0.18741608
    %v141 = vmul.f32 %v132, %v140
    %v142 = vadd.f32 %v141, 1.1283791
    %v143 = vmul.f32 %v90, %v142
    %v144 = vmul.f32 %v132, 3.8918573e-05
    %v145 = vadd.f32 %v144, 0.001143296
    %v146 = vmul.f32 %v132, %v145
    %v147 = vadd.f32 %v146, 0.014752088
    %v148 = vmul.f32 %v132, %v147
    %v149 = vadd.f32 %v148, 0.112945676
    %v150 = vmul.f32 %v132, %v149
    %v151 = vadd.f32 %v150, 0.4994258
    %v152 = vmul.f32 %v132, %v151
    %v153 = vadd.f32 %v152, 1.0
    %v154 = vrcp.pop %v153
    %v155 = vmul.f32 %v153, %v154
    %v156 = vsub.f32 1.0, %v155
    %v157 = vmul.f32 %v154, %v156
    %v158 = vadd.f32 %v154, %v157
    %vm159 = vweird.f32 %v153
    %vm160 = vweird.f32 %v154
    %vm161 = vmor %vm159, %vm160
    %v162 = vsel %vm161, %v154, %v158
    %v163 = vand.u32 2147483647, %v153
    %vm164 = vcmp.eq.f32.partialorder %v163, 8.507059e+37
    %v165 = vand.u32 %v153, 2147483648
    %v166 = vor.u32 1.1754944e-38, %v165
    %v167 = vsel %vm164, %v166, %v162
    %v168 = vmul.f32 %v143, %v167
    %v169 = vmin.f32 %v168, 1.0
    %v170 = vmax.f32 %v169, -1.0
    %v171 = vadd.f32 %v130, 1.0
    %v172 = vadd.f32 %v170, 1.0
    %v173 = vmul.f32 %v87, %v171
    %v174 = vmul.f32 %v88, %v172
    %vm175 = vcmask 523264
    %176 = vst.msk [vmem:[#allocation7] sm:$0xff] %vm175, %v173
    %177 = vst.msk [vmem:[#allocation7 + $0x8] sm:$0xff] %vm175, %v174
    // Predicated region
    $region22: #{tpu_custom_call.1} parent=1 // pred_check
      _
    $region23: #{tpu_custom_call.1} parent=1 // pred_check_branch
      %179 = sbr.rel (0) target = $region25
    $region24: #{tpu_custom_call.1} parent=1 // pred_region
      %181 = vsyncadd [#allocation4], 0
      %s182 = sshll.u32 [#allocation7], 4
      %s183 = int_to_ptr.vmem [resolvable:$true] %s182
      %s184 = sshll.u32 %s3, 4
      %s185 = int_to_ptr.hbm [resolvable:$true] %s184
      %190 = dma.vmem_to_hbm [thread:$0]  %s183, 256, %s185, [#allocation4], 128, 128, 8
    $region25: #{tpu_custom_call.1} parent=1 // pred_fallthru
      _
    // Predicated region
    $region26: #{tpu_custom_call.1} parent=1 // pred_check
      _
    $region27: #{tpu_custom_call.1} parent=1 // pred_check_branch
      %192 = sbr.rel (0) target = $region29
    $region28: #{tpu_custom_call.1} parent=1 // pred_region
      %194 = dma.done [#allocation4], 256
    $region29: #{tpu_custom_call.1} parent=1 // pred_fallthru
      _
    %195 = vsyncpa [#allocation3], 1
    %196 = vsyncpa [#allocation6], 1
    %197 = vsyncpa [#allocation4], 1

</llo_original>
